<compile_context>
chip_gen: v7x
topology: tpu7x:2x2x1
jax: 0.10.0
libtpu: 0.0.40
codegen_flags: <defaults>
</compile_context>

<pallas_src>
import functools

import jax
import jax.numpy as jnp
from jax import lax
from jax.experimental import pallas as pl
from jax.experimental.pallas import tpu as pltpu

LANES = 128                    # lane width (fast axis)
NCORES = 2                     # leading "parallel" grid axis (v7x: 2 TCs/chip)
MAX_TR = 8192                  # sublane rows per grid step (4 MiB/input/buffer)
ALIGN = NCORES * 8 * LANES     # pad granule so rows_per_core is a multiple of 8
SMOOTH = 1.0
VMEM_LIMIT_BYTES = 32 * 1024 * 1024


def _dice_kernel(n_ref, x_ref, t_ref, out_ref, *, tr, rows_per_core):
    """Accumulate per-core, per-lane partials of sum(sig(x)*t) and sum(sig(x)+t).

    out_ref block is (1, 2, 8, 128): [0,0] = intersection partials,
    [0,1] = (sig(x)+t) partials. Resident in VMEM across the inner axis.
    """
    p = pl.program_id(0)   # parallel (core) axis
    i = pl.program_id(1)   # arbitrary (streaming) axis

    @pl.when(i == 0)
    def _():
        out_ref[...] = jnp.zeros_like(out_ref)

    x = x_ref[0].astype(jnp.float32)     # (tr, LANES)
    t = t_ref[0].astype(jnp.float32)
    sig = jax.nn.sigmoid(x)

    block_elems = tr * LANES
    core_elems = rows_per_core * LANES
    # Scalar count of valid elements remaining in this core's chunk at this
    # block's start (covers: global tail `n`, wrapper zero-pad, and the
    # Pallas-padded garbage rows of a partial last inner block). Pure SMEM
    # scalar math; no vector int32 flat index is ever formed.
    rem = jnp.minimum(n_ref[0] - p * core_elems, core_elems) - i * block_elems

    def _accum(prod, tot):
        # (tr,128) -> (tr//8, 8, 128) sum(axis=0): pure VALU vreg adds into a
        # full-vreg (8,128) accumulator slice of the resident output block.
        out_ref[0, 0] += prod.reshape(tr // 8, 8, LANES).sum(axis=0)
        out_ref[0, 1] += tot.reshape(tr // 8, 8, LANES).sum(axis=0)

    @pl.when(rem >= block_elems)
    def _():
        # Fast path: whole block valid, no mask work.
        _accum(sig * t, sig + t)

    @pl.when(rem < block_elems)
    def _():
        # Tail / padded block: mask against the per-block remaining count.
        lr = lax.broadcasted_iota(jnp.int32, (tr, LANES), 0)
        ln = lax.broadcasted_iota(jnp.int32, (tr, LANES), 1)
        valid = (lr * LANES + ln) < rem
        _accum(jnp.where(valid, sig * t, 0.0),
               jnp.where(valid, sig + t, 0.0))


@jax.jit
def dice_loss(inputs, targets, smooth=SMOOTH):
    """Matches: 1 - (2*sum(sig(x)*t) + s) / (sum(sig(x)) + sum(t) + s)."""
    x = inputs.reshape(-1)
    t = targets.reshape(-1)
    n = x.shape[0]

    # Pad to a multiple of 2048 so the (NCORES, rows_per_core, 128) reshape is
    # contiguous and rows_per_core is a multiple of 8. Padded elements are
    # masked in-kernel (sigmoid(0)=0.5 would otherwise corrupt the sums).
    n_pad = pl.cdiv(n, ALIGN) * ALIGN
    pad = n_pad - n
    if pad:
        x = jnp.pad(x, (0, pad))
        t = jnp.pad(t, (0, pad))

    rows_per_core = n_pad // (NCORES * LANES)     # multiple of 8
    tr = min(MAX_TR, rows_per_core)               # multiple of 8 in both cases
    inner = pl.cdiv(rows_per_core, tr)

    x3 = x.reshape(NCORES, rows_per_core, LANES)
    t3 = t.reshape(NCORES, rows_per_core, LANES)
    n_arr = jnp.array([n], dtype=jnp.int32)       # elements limited to < 2**31

    parts = pl.pallas_call(
        functools.partial(_dice_kernel, tr=tr, rows_per_core=rows_per_core),
        out_shape=jax.ShapeDtypeStruct((NCORES, 2, 8, LANES), jnp.float32),
        grid_spec=pltpu.PrefetchScalarGridSpec(
            num_scalar_prefetch=1,
            grid=(NCORES, inner),
            in_specs=[
                pl.BlockSpec((1, tr, LANES), lambda p, i, n_sref: (p, i, 0)),
                pl.BlockSpec((1, tr, LANES), lambda p, i, n_sref: (p, i, 0)),
            ],
            out_specs=pl.BlockSpec((1, 2, 8, LANES),
                                   lambda p, i, n_sref: (p, 0, 0, 0)),
        ),
        compiler_params=pltpu.CompilerParams(
            dimension_semantics=("parallel", "arbitrary"),
            vmem_limit_bytes=VMEM_LIMIT_BYTES,
        ),
    )(n_arr, x3, t3)

    # Tiny XLA finalize: collapse per-core per-lane partials and divide.
    inter = jnp.sum(parts[:, 0])
    total = jnp.sum(parts[:, 1])
    dice = (2.0 * inter + smooth) / (total + smooth)
    return 1.0 - dice


def _dice_loss_ref(inputs, targets, smooth=SMOOTH):
    x = jax.nn.sigmoid(inputs.astype(jnp.float32)).reshape(-1)
    t = targets.astype(jnp.float32).reshape(-1)
    inter = jnp.sum(x * t)
    dice = (2.0 * inter + smooth) / (jnp.sum(x) + jnp.sum(t) + smooth)
    return 1.0 - dice


if __name__ == "__main__":
    key = jax.random.PRNGKey(0)
    k1, k2, k3, k4, k5, k6 = jax.random.split(key, 6)

    # Case 1: NCHW = (2, 4, 16, 16) logits + binary targets.
    inputs = jax.random.normal(k1, (2, 4, 16, 16), dtype=jnp.float32)
    targets = (jax.random.uniform(k2, (2, 4, 16, 16)) > 0.5).astype(jnp.float32)
    loss = dice_loss(inputs, targets)
    jax.block_until_ready(loss)
    ref = _dice_loss_ref(inputs, targets)
    assert jnp.allclose(loss, ref, atol=1e-5, rtol=1e-5), (loss, ref)

    # Case 2: odd size (n not a multiple of 2048) -> exercises tail masking.
    inputs2 = jax.random.normal(k3, (2, 3, 17, 19), dtype=jnp.float32)
    targets2 = (jax.random.uniform(k4, (2, 3, 17, 19)) > 0.5).astype(jnp.float32)
    loss2 = dice_loss(inputs2, targets2)
    jax.block_until_ready(loss2)
    ref2 = _dice_loss_ref(inputs2, targets2)
    assert jnp.allclose(loss2, ref2, atol=1e-5, rtol=1e-5), (loss2, ref2)

    # Case 3: rows_per_core > MAX_TR with a partial last inner block ->
    # exercises multi-step accumulation + per-block masking on both cores.
    inputs3 = jax.random.normal(k5, (2, 1025, 32, 32), dtype=jnp.float32)
    targets3 = (jax.random.uniform(k6, (2, 1025, 32, 32)) > 0.5).astype(jnp.float32)
    loss3 = dice_loss(inputs3, targets3)
    jax.block_until_ready(loss3)
    ref3 = _dice_loss_ref(inputs3, targets3)
    assert jnp.allclose(loss3, ref3, atol=1e-5, rtol=1e-5), (loss3, ref3)

    print("KERNEL_OK")
</pallas_src>

<mosaic_0001>
module attributes {stable_mosaic.version = 11 : i64} {
  func.func @_dice_kernel(%arg0: i32, %arg1: i32, %arg2: memref<1xi32, #tpu.memory_space<smem>>, %arg3: memref<1x8x128xf32, #tpu.memory_space<vmem>>, %arg4: memref<1x8x128xf32, #tpu.memory_space<vmem>>, %arg5: memref<1x2x8x128xf32, #tpu.memory_space<vmem>>) attributes {dimension_semantics = [#tpu.dimension_semantics<parallel>, #tpu.dimension_semantics<arbitrary>], iteration_bounds = array<i64: 2, 1>, scalar_prefetch = 1 : i64, scratch_operands = 0 : i64, tpu.core_type = #tpu.core_type<tc>, window_params = [{transform_indices = @transform_0, window_bounds = array<i64: 1, 8, 128>}, {transform_indices = @transform_1, window_bounds = array<i64: 1, 8, 128>}, {transform_indices = @transform_2, window_bounds = array<i64: 1, 2, 8, 128>}]} {
    %c0_i32 = arith.constant 0 : i32
    %0 = arith.cmpi eq, %arg1, %c0_i32 : i32
    %1 = arith.extui %0 : i1 to i32
    %c0_i32_0 = arith.constant 0 : i32
    %2 = arith.cmpi ne, %1, %c0_i32_0 : i32
    scf.if %2 {
      %cst_13 = arith.constant 0.000000e+00 : f32
      %24 = vector.broadcast %cst_13 : f32 to vector<1x2x8x128xf32>
      %c0_14 = arith.constant 0 : index
      %c0_15 = arith.constant 0 : index
      %c0_16 = arith.constant 0 : index
      %c0_17 = arith.constant 0 : index
      %25 = vector.load %arg5[%c0_14, %c0_15, %c0_16, %c0_17] : memref<1x2x8x128xf32, #tpu.memory_space<vmem>>, vector<1x2x8x128xf32>
      tpu.vector_store %arg5[%c0_14, %c0_15, %c0_16, %c0_17], %24 {strides = array<i32>} : memref<1x2x8x128xf32, #tpu.memory_space<vmem>>, vector<1x2x8x128xf32>,
    } else {
    }
    %c0 = arith.constant 0 : index
    %c0_1 = arith.constant 0 : index
    %c0_2 = arith.constant 0 : index
    %3 = vector.load %arg3[%c0, %c0_1, %c0_2] : memref<1x8x128xf32, #tpu.memory_space<vmem>>, vector<1x8x128xf32>
    %4 = vector.shape_cast %3 : vector<1x8x128xf32> to vector<8x128xf32>
    %c0_3 = arith.constant 0 : index
    %c0_4 = arith.constant 0 : index
    %c0_5 = arith.constant 0 : index
    %5 = vector.load %arg4[%c0_3, %c0_4, %c0_5] : memref<1x8x128xf32, #tpu.memory_space<vmem>>, vector<1x8x128xf32>
    %6 = vector.shape_cast %5 : vector<1x8x128xf32> to vector<8x128xf32>
    %7 = arith.negf %4 : vector<8x128xf32>
    %8 = math.exp %7 : vector<8x128xf32>
    %cst = arith.constant 1.000000e+00 : f32
    %9 = vector.broadcast %cst : f32 to vector<8x128xf32>
    %10 = arith.addf %9, %8 : vector<8x128xf32>
    %11 = arith.divf %9, %10 : vector<8x128xf32>
    %c0_6 = arith.constant 0 : index
    %12 = memref.load %arg2[%c0_6] : memref<1xi32, #tpu.memory_space<smem>>
    %c1024_i32 = arith.constant 1024 : i32
    %13 = arith.muli %arg0, %c1024_i32 : i32
    %14 = arith.subi %12, %13 : i32
    %c1024_i32_7 = arith.constant 1024 : i32
    %15 = arith.minsi %14, %c1024_i32_7 : i32
    %c1024_i32_8 = arith.constant 1024 : i32
    %16 = arith.muli %arg1, %c1024_i32_8 : i32
    %17 = arith.subi %15, %16 : i32
    %c1024_i32_9 = arith.constant 1024 : i32
    %18 = arith.cmpi sge, %17, %c1024_i32_9 : i32
    %19 = arith.extui %18 : i1 to i32
    %c0_i32_10 = arith.constant 0 : i32
    %20 = arith.cmpi ne, %19, %c0_i32_10 : i32
    scf.if %20 {
      %24 = arith.mulf %11, %6 : vector<8x128xf32>
      %25 = arith.addf %11, %6 : vector<8x128xf32>
      %c0_13 = arith.constant 0 : index
      %c0_14 = arith.constant 0 : index
      %c0_15 = arith.constant 0 : index
      %c0_16 = arith.constant 0 : index
      %26 = vector.load %arg5[%c0_13, %c0_14, %c0_15, %c0_16] : memref<1x2x8x128xf32, #tpu.memory_space<vmem>>, vector<1x1x8x128xf32>
      %27 = vector.shape_cast %26 : vector<1x1x8x128xf32> to vector<8x128xf32>
      %28 = vector.shape_cast %24 : vector<8x128xf32> to vector<1x8x128xf32>
      %cst_17 = arith.constant dense<0.000000e+00> : vector<8x128xf32>
      %29 = vector.multi_reduction <add>, %28, %cst_17 [0] : vector<1x8x128xf32> to vector<8x128xf32>
      %30 = arith.addf %27, %29 : vector<8x128xf32>
      %c0_18 = arith.constant 0 : index
      %c0_19 = arith.constant 0 : index
      %c0_20 = arith.constant 0 : index
      %c0_21 = arith.constant 0 : index
      %31 = vector.load %arg5[%c0_18, %c0_19, %c0_20, %c0_21] : memref<1x2x8x128xf32, #tpu.memory_space<vmem>>, vector<1x1x8x128xf32>
      %32 = vector.shape_cast %31 : vector<1x1x8x128xf32> to vector<8x128xf32>
      %33 = vector.shape_cast %30 : vector<8x128xf32> to vector<1x1x8x128xf32>
      tpu.vector_store %arg5[%c0_18, %c0_19, %c0_20, %c0_21], %33 {strides = array<i32>} : memref<1x2x8x128xf32, #tpu.memory_space<vmem>>, vector<1x1x8x128xf32>,
      %c0_22 = arith.constant 0 : index
      %c1 = arith.constant 1 : index
      %c0_23 = arith.constant 0 : index
      %c0_24 = arith.constant 0 : index
      %34 = vector.load %arg5[%c0_22, %c1, %c0_23, %c0_24] : memref<1x2x8x128xf32, #tpu.memory_space<vmem>>, vector<1x1x8x128xf32>
      %35 = vector.shape_cast %34 : vector<1x1x8x128xf32> to vector<8x128xf32>
      %36 = vector.shape_cast %25 : vector<8x128xf32> to vector<1x8x128xf32>
      %cst_25 = arith.constant dense<0.000000e+00> : vector<8x128xf32>
      %37 = vector.multi_reduction <add>, %36, %cst_25 [0] : vector<1x8x128xf32> to vector<8x128xf32>
      %38 = arith.addf %35, %37 : vector<8x128xf32>
      %c0_26 = arith.constant 0 : index
      %c1_27 = arith.constant 1 : index
      %c0_28 = arith.constant 0 : index
      %c0_29 = arith.constant 0 : index
      %39 = vector.load %arg5[%c0_26, %c1_27, %c0_28, %c0_29] : memref<1x2x8x128xf32, #tpu.memory_space<vmem>>, vector<1x1x8x128xf32>
      %40 = vector.shape_cast %39 : vector<1x1x8x128xf32> to vector<8x128xf32>
      %41 = vector.shape_cast %38 : vector<8x128xf32> to vector<1x1x8x128xf32>
      tpu.vector_store %arg5[%c0_26, %c1_27, %c0_28, %c0_29], %41 {strides = array<i32>} : memref<1x2x8x128xf32, #tpu.memory_space<vmem>>, vector<1x1x8x128xf32>,
    } else {
    }
    %c1024_i32_11 = arith.constant 1024 : i32
    %21 = arith.cmpi slt, %17, %c1024_i32_11 : i32
    %22 = arith.extui %21 : i1 to i32
    %c0_i32_12 = arith.constant 0 : i32
    %23 = arith.cmpi ne, %22, %c0_i32_12 : i32
    scf.if %23 {
      %24 = tpu.iota {dimensions = array<i32: 0>} : vector<8x128xi32>
      %25 = tpu.iota {dimensions = array<i32: 1>} : vector<8x128xi32>
      %c128_i32 = arith.constant 128 : i32
      %26 = vector.broadcast %c128_i32 : i32 to vector<8x128xi32>
      %27 = arith.muli %24, %26 : vector<8x128xi32>
      %28 = arith.addi %27, %25 : vector<8x128xi32>
      %29 = vector.broadcast %17 : i32 to vector<8x128xi32>
      %30 = arith.cmpi slt, %28, %29 : vector<8x128xi32>
      %31 = arith.mulf %11, %6 : vector<8x128xf32>
      %cst_13 = arith.constant 0.000000e+00 : f32
      %32 = vector.broadcast %cst_13 : f32 to vector<8x128xf32>
      %33 = arith.select %30, %31, %32 : vector<8x128xi1>, vector<8x128xf32>
      %34 = arith.addf %11, %6 : vector<8x128xf32>
      %cst_14 = arith.constant 0.000000e+00 : f32
      %35 = vector.broadcast %cst_14 : f32 to vector<8x128xf32>
      %36 = arith.select %30, %34, %35 : vector<8x128xi1>, vector<8x128xf32>
      %c0_15 = arith.constant 0 : index
      %c0_16 = arith.constant 0 : index
      %c0_17 = arith.constant 0 : index
      %c0_18 = arith.constant 0 : index
      %37 = vector.load %arg5[%c0_15, %c0_16, %c0_17, %c0_18] : memref<1x2x8x128xf32, #tpu.memory_space<vmem>>, vector<1x1x8x128xf32>
      %38 = vector.shape_cast %37 : vector<1x1x8x128xf32> to vector<8x128xf32>
      %39 = vector.shape_cast %33 : vector<8x128xf32> to vector<1x8x128xf32>
      %cst_19 = arith.constant dense<0.000000e+00> : vector<8x128xf32>
      %40 = vector.multi_reduction <add>, %39, %cst_19 [0] : vector<1x8x128xf32> to vector<8x128xf32>
      %41 = arith.addf %38, %40 : vector<8x128xf32>
      %c0_20 = arith.constant 0 : index
      %c0_21 = arith.constant 0 : index
      %c0_22 = arith.constant 0 : index
      %c0_23 = arith.constant 0 : index
      %42 = vector.load %arg5[%c0_20, %c0_21, %c0_22, %c0_23] : memref<1x2x8x128xf32, #tpu.memory_space<vmem>>, vector<1x1x8x128xf32>
      %43 = vector.shape_cast %42 : vector<1x1x8x128xf32> to vector<8x128xf32>
      %44 = vector.shape_cast %41 : vector<8x128xf32> to vector<1x1x8x128xf32>
      tpu.vector_store %arg5[%c0_20, %c0_21, %c0_22, %c0_23], %44 {strides = array<i32>} : memref<1x2x8x128xf32, #tpu.memory_space<vmem>>, vector<1x1x8x128xf32>,
      %c0_24 = arith.constant 0 : index
      %c1 = arith.constant 1 : index
      %c0_25 = arith.constant 0 : index
      %c0_26 = arith.constant 0 : index
      %45 = vector.load %arg5[%c0_24, %c1, %c0_25, %c0_26] : memref<1x2x8x128xf32, #tpu.memory_space<vmem>>, vector<1x1x8x128xf32>
      %46 = vector.shape_cast %45 : vector<1x1x8x128xf32> to vector<8x128xf32>
      %47 = vector.shape_cast %36 : vector<8x128xf32> to vector<1x8x128xf32>
      %cst_27 = arith.constant dense<0.000000e+00> : vector<8x128xf32>
      %48 = vector.multi_reduction <add>, %47, %cst_27 [0] : vector<1x8x128xf32> to vector<8x128xf32>
      %49 = arith.addf %46, %48 : vector<8x128xf32>
      %c0_28 = arith.constant 0 : index
      %c1_29 = arith.constant 1 : index
      %c0_30 = arith.constant 0 : index
      %c0_31 = arith.constant 0 : index
      %50 = vector.load %arg5[%c0_28, %c1_29, %c0_30, %c0_31] : memref<1x2x8x128xf32, #tpu.memory_space<vmem>>, vector<1x1x8x128xf32>
      %51 = vector.shape_cast %50 : vector<1x1x8x128xf32> to vector<8x128xf32>
      %52 = vector.shape_cast %49 : vector<8x128xf32> to vector<1x1x8x128xf32>
      tpu.vector_store %arg5[%c0_28, %c1_29, %c0_30, %c0_31], %52 {strides = array<i32>} : memref<1x2x8x128xf32, #tpu.memory_space<vmem>>, vector<1x1x8x128xf32>,
    } else {
    }
    return
  }
  func.func @transform_0(%arg0: i32, %arg1: i32, %arg2: memref<1xi32, #tpu.memory_space<smem>>) -> (i32, i32, i32) {
    %c0_i32 = arith.constant 0 : i32
    %c0_i32_0 = arith.constant 0 : i32
    return %arg0, %arg1, %c0_i32 : i32, i32, i32
  }
  func.func @transform_1(%arg0: i32, %arg1: i32, %arg2: memref<1xi32, #tpu.memory_space<smem>>) -> (i32, i32, i32) {
    %c0_i32 = arith.constant 0 : i32
    %c0_i32_0 = arith.constant 0 : i32
    return %arg0, %arg1, %c0_i32 : i32, i32, i32
  }
  func.func @transform_2(%arg0: i32, %arg1: i32, %arg2: memref<1xi32, #tpu.memory_space<smem>>) -> (i32, i32, i32, i32) {
    %c0_i32 = arith.constant 0 : i32
    %c0_i32_0 = arith.constant 0 : i32
    %c0_i32_1 = arith.constant 0 : i32
    %c0_i32_2 = arith.constant 0 : i32
    return %arg0, %c0_i32, %c0_i32_0, %c0_i32_1 : i32, i32, i32, i32
  }
}

</mosaic_0001>

<llo_original>
// kernel: dice_loss.1
$region0: #{dice_loss.1}
  #allocation0 [shape = 'u32[]', space=smem, size = 0x4, offset = 0x4, fixed_abs, tag = 'smem constant byte address 0x4 - core index']
  #allocation1 [shape = 'u32[144,128]{1,0:T(1,128)}', space=vmem, size = 0x12000, scoped, tag = 'internal scratch']
  #allocation2 [shape = 's32[1]{0}', space=sflag, size = 0x4, scoped, tag = 'scoped memory for dice_loss.1']
  #allocation3 [shape = 's32[1]{0:T(128)S(6)}', space=smem, size = 0x200, scoped, tag = 'prefetched SMEM operand 0']
  %s0 = inlined_call_operand.<no memory space> [shape: s32[1], index: 0, kind: input, shape index: {}]
  %s1 = inlined_call_operand.vmem [shape: f32[2,8,128], index: 1, kind: input, shape index: {}]
  %s2 = inlined_call_operand.vmem [shape: f32[2,8,128], index: 2, kind: input, shape index: {}]
  %s3 = inlined_call_operand.vmem [shape: f32[2,2,8,128], index: 3, kind: output, shape index: {}]
  %s4 = sld [smem:[#allocation0]]
  $region53: #{dice_loss.1} parent=0
    _
  %s6 = ssub.s32 1, %s4
  %s7 = scalar_select 0, %s6, %s4
  %8 = sst [smem:[#allocation3]] %s0
  loop: start=0, step=1, limit=4
  $region2: #{dice_loss.1} parent=0 // loop_pre_header
    _
  $region3: #{dice_loss.1} parent=0 // loop_header
    %s10 = sphi 0, %s14
    %p11 = scmp.ge.s32.totalorder %s10, 4
    %s17 = sphi 0, %s29
    %s18 = sphi 0, %s25
    %s19 = sphi 0, %s17
    %s20 = sphi 0, %s18
    %s21 = sphi 0, %s19
    %s22 = sphi 0, %s20
    %s34 = sphi 0, %s36
    %s37 = sphi 0, %s34
    %s38 = sphi 0, %s37
    %s54 = sphi 0, %s38
    %s62 = sphi 0, %s64
    %s65 = sphi 0, %s62
    %s66 = sphi 0, %s65
    %s82 = sphi 0, %s66
    %s88 = sphi 0, %s90
    %s91 = sphi 0, %s88
    %s92 = sphi 0, %s91
    %s108 = sphi 0, %s92
  $region4: #{dice_loss.1} parent=0 // loop_header_branch
    %13 = sbr.rel (%p11) target = $region8
  $region5: #{dice_loss.1} parent=0 // loop_body
    %s15 = ssub.s32 %s10, 1
    %s16 = ssub.s32 %s10, 2
    %s23 = sadd.s32 1, %s18
    %p24 = scmp.ge.s32.totalorder %s23, 1
    %s25 = scalar_select %p24, 0, %s23
    %s26 = sadd.s32 1, %s17
    %s27 = scalar_select %p24, %s26, %s17
    %p28 = scmp.ge.s32.totalorder %s27, 2
    %s29 = scalar_select %p28, 0, %s27
    %s30 = ssub.s32 %s17, %s29
    %s31 = ssub.s32 %s18, %s25
    %s32 = sor.u32 %s30, %s31
    %p33 = scmp.eq.s32.totalorder %s32, 0
    %s35 = sadd.s32 %s34, 1
    %s36 = scalar_select %p33, %s34, %s35
    %p39 = pneg %p33
    %p40 = scmp.eq.s32.totalorder %s10, 1
    %p41 = por %p39, %p40
    %p42 = scmp.ne.s32.totalorder %s34, %s37
    %p43 = scmp.eq.s32.totalorder %s10, 0
    %p44 = por %p42, %p43
    %p45 = scmp.ne.s32.totalorder %s34, %s37
    %p46 = scmp.eq.s32.totalorder %s15, 1
    %p47 = por %p45, %p46
    %p48 = scmp.ne.s32.totalorder %s37, %s38
    %p49 = scmp.eq.s32.totalorder %s15, 0
    %p50 = por %p48, %p49
    %p51 = scmp.ne.s32.totalorder %s37, %s38
    %p52 = scmp.eq.s32.totalorder %s16, 1
    %p53 = por %p51, %p52
    %p55 = scmp.ne.s32.totalorder %s38, %s54
    %p56 = scmp.eq.s32.totalorder %s16, 0
    %p57 = por %p55, %p56
    %s58 = ssub.s32 %s17, %s29
    %s59 = ssub.s32 %s18, %s25
    %s60 = sor.u32 %s58, %s59
    %p61 = scmp.eq.s32.totalorder %s60, 0
    %s63 = sadd.s32 %s62, 1
    %s64 = scalar_select %p61, %s62, %s63
    %p67 = pneg %p61
    %p68 = scmp.eq.s32.totalorder %s10, 1
    %p69 = por %p67, %p68
    %p70 = scmp.ne.s32.totalorder %s62, %s65
    %p71 = scmp.eq.s32.totalorder %s10, 0
    %p72 = por %p70, %p71
    %p73 = scmp.ne.s32.totalorder %s62, %s65
    %p74 = scmp.eq.s32.totalorder %s15, 1
    %p75 = por %p73, %p74
    %p76 = scmp.ne.s32.totalorder %s65, %s66
    %p77 = scmp.eq.s32.totalorder %s15, 0
    %p78 = por %p76, %p77
    %p79 = scmp.ne.s32.totalorder %s65, %s66
    %p80 = scmp.eq.s32.totalorder %s16, 1
    %p81 = por %p79, %p80
    %p83 = scmp.ne.s32.totalorder %s66, %s82
    %p84 = scmp.eq.s32.totalorder %s16, 0
    %p85 = por %p83, %p84
    %s86 = ssub.s32 %s17, %s29
    %p87 = scmp.eq.s32.totalorder %s86, 0
    %s89 = sadd.s32 %s88, 1
    %s90 = scalar_select %p87, %s88, %s89
    %p93 = pneg %p87
    %p94 = scmp.eq.s32.totalorder %s10, 1
    %p95 = por %p93, %p94
    %p96 = scmp.ne.s32.totalorder %s88, %s91
    %p97 = scmp.eq.s32.totalorder %s10, 0
    %p98 = por %p96, %p97
    %p99 = scmp.ne.s32.totalorder %s88, %s91
    %p100 = scmp.eq.s32.totalorder %s15, 1
    %p101 = por %p99, %p100
    %p102 = scmp.ne.s32.totalorder %s91, %s92
    %p103 = scmp.eq.s32.totalorder %s15, 0
    %p104 = por %p102, %p103
    %p105 = scmp.ne.s32.totalorder %s91, %s92
    %p106 = scmp.eq.s32.totalorder %s16, 1
    %p107 = por %p105, %p106
    %p109 = scmp.ne.s32.totalorder %s92, %s108
    %p110 = scmp.eq.s32.totalorder %s16, 0
    %p111 = por %p109, %p110
    %p112 = scmp.le.s32.totalorder 1, %s10
    %p113 = scmp.lt.s32.totalorder %s10, 3
    %p114 = pnand %p112, %p113
    %p115 = pneg %p114
    // Predicated region
    $region9: #{dice_loss.1} parent=5 // pred_check
      _
    $region10: #{dice_loss.1} parent=5 // pred_check_branch
      %117 = sbr.rel (%p114) target = $region12
    $region11: #{dice_loss.1} parent=5 // pred_region
      %s118 = ssub.s32 %s10, 1
    $region12: #{dice_loss.1} parent=5 // pred_fallthru
      _
    %p119 = scmp.lt.s32.totalorder %s10, 2
    // Predicated region
    $region13: #{dice_loss.1} parent=5 // pred_check
      %p120 = pneg %p119
    $region14: #{dice_loss.1} parent=5 // pred_check_branch
      %122 = sbr.rel (%p120) target = $region16
    $region15: #{dice_loss.1} parent=5 // pred_region
      // Predicated region
      $region17: #{dice_loss.1} parent=15 // pred_check
        %p123 = pneg %p44
      $region18: #{dice_loss.1} parent=15 // pred_check_branch
        %125 = sbr.rel (%p123) target = $region20
      $region19: #{dice_loss.1} parent=15 // pred_region
        %p126 = scmp.lt.s32.totalorder %s17, 1
        %s127 = scalar_select %p126, %s17, 1
        %p128 = scmp.lt.s32.totalorder %s18, 0
        %s129 = scalar_select %p128, %s18, 0
        %s130 = sadd.s32 %s129, %s127
        %s131 = smul.addr %s130, 8
        %s132 = scalar_lea.vmem %s1, %s131
      $region20: #{dice_loss.1} parent=15 // pred_fallthru
        _
      // Predicated region
      $region21: #{dice_loss.1} parent=15 // pred_check
        %p133 = pneg %p72
      $region22: #{dice_loss.1} parent=15 // pred_check_branch
        %135 = sbr.rel (%p133) target = $region24
      $region23: #{dice_loss.1} parent=15 // pred_region
        %p136 = scmp.lt.s32.totalorder %s17, 1
        %s137 = scalar_select %p136, %s17, 1
        %p138 = scmp.lt.s32.totalorder %s18, 0
        %s139 = scalar_select %p138, %s18, 0
        %s140 = sadd.s32 %s139, %s137
        %s141 = smul.addr %s140, 8
        %s142 = scalar_lea.vmem %s2, %s141
      $region24: #{dice_loss.1} parent=15 // pred_fallthru
        _
    $region16: #{dice_loss.1} parent=5 // pred_fallthru
      _
    %p143 = scmp.le.s32.totalorder 1, %s10
    %p144 = scmp.lt.s32.totalorder %s10, 3
    %p145 = pnand %p143, %p144
    %p146 = pneg %p145
    // Predicated region
    $region25: #{dice_loss.1} parent=5 // pred_check
      _
    $region26: #{dice_loss.1} parent=5 // pred_check_branch
      %148 = sbr.rel (%p145) target = $region28
    $region27: #{dice_loss.1} parent=5 // pred_region
      %s149 = ssub.s32 %s10, 1
      %p150 = scmp.lt.s32.totalorder %s19, 1
      %s151 = scalar_select %p150, %s19, 1
      %p152 = scmp.lt.s32.totalorder %s20, 0
      %s153 = scalar_select %p152, %s20, 0
      %s154 = sadd.s32 %s153, %s151
      %s155 = smul.addr %s154, 8
      %s156 = scalar_lea.vmem %s1, %s155
      %p157 = pneg %p50
      %p158 = pneg %p47
      %p159 = scmp.lt.s32.totalorder %s19, 1
      %s160 = scalar_select %p159, %s19, 1
      %p161 = scmp.lt.s32.totalorder %s20, 0
      %s162 = scalar_select %p161, %s20, 0
      %s163 = sadd.s32 %s162, %s160
      %s164 = smul.addr %s163, 8
      %s165 = scalar_lea.vmem %s2, %s164
      %p166 = pneg %p78
      %p167 = pneg %p75
      %p168 = pneg %p104
      %p169 = pneg %p101
      %p170 = scmp.lt.s32.totalorder %s19, 1
      %s171 = scalar_select %p170, %s19, 1
      %s172 = smul.addr %s171, 2
      %s173 = smul.addr %s172, 8
      %s174 = scalar_lea.vmem %s3, %s173
      %p175 = scmp.lt.s32.totalorder %s19, 1
      %s176 = scalar_select %p175, %s19, 1
      %p177 = scmp.lt.s32.totalorder %s20, 0
      %s178 = scalar_select %p177, %s20, 0
      %s179 = sadd.s32 %s178, %s176
      %s180 = smul.addr %s179, 8
      %s181 = scalar_lea.vmem %s1, %s180
      %p182 = scmp.lt.s32.totalorder %s19, 1
      %s183 = scalar_select %p182, %s19, 1
      %p184 = scmp.lt.s32.totalorder %s20, 0
      %s185 = scalar_select %p184, %s20, 0
      %s186 = sadd.s32 %s185, %s183
      %s187 = smul.addr %s186, 8
      %s188 = scalar_lea.vmem %s2, %s187
      %p189 = scmp.lt.s32.totalorder %s19, 1
      %s190 = scalar_select %p189, %s19, 1
      %s191 = smul.addr %s190, 2
      %s192 = smul.addr %s191, 8
      %s193 = scalar_lea.vmem %s3, %s192
      %p194 = scmp.eq.s32.totalorder %s20, 0
      // Predicated region
      $region29: #{dice_loss.1} parent=27 // pred_check
        %p195 = pneg %p194
      $region30: #{dice_loss.1} parent=27 // pred_check_branch
        %197 = sbr.rel (%p195) target = $region32
      $region31: #{dice_loss.1} parent=27 // pred_region
        %198 = vst [vmem:[%s193] sm:$0xff] 0.0
        %199 = vst [vmem:[%s193 + $0x8] sm:$0xff] 0.0
      $region32: #{dice_loss.1} parent=27 // pred_fallthru
        _
      %v200 = vld [vmem:[%s181] sm:$0xff]
      %v201 = vld [vmem:[%s188] sm:$0xff]
      %v202 = vxor.u32 %v200, 2147483648
      %v203 = vmul.f32 %v202, 1.442695
      %v204 = vpow.pop %v203
      %v205 = vadd.f32 %v204, 1.0
      %v206 = vrcp.pop %v205
      %v207 = vmul.f32 1.0, %v206
      %s208 = sld [smem:[#allocation3]]
      %s209 = smul.u32 %s19, 1024
      %s210 = ssub.s32 %s208, %s209
      %p211 = scmp.lt.s32.totalorder %s210, 1024
      %s212 = scalar_select %p211, %s210, 1024
      %s213 = smul.u32 %s20, 1024
      %s214 = ssub.s32 %s212, %s213
      %p215 = scmp.ge.s32.totalorder %s214, 1024
      // Predicated region
      $region33: #{dice_loss.1} parent=27 // pred_check
        %p216 = pneg %p215
      $region34: #{dice_loss.1} parent=27 // pred_check_branch
        %218 = sbr.rel (%p216) target = $region36
      $region35: #{dice_loss.1} parent=27 // pred_region
        %v219 = vmul.f32 %v207, %v201
        %v220 = vadd.f32 %v207, %v201
        %v221 = vld [vmem:[%s193] sm:$0xff]
        %v222 = vadd.f32 %v219, 0.0
        %v223 = vadd.f32 %v221, %v222
        %224 = vst [vmem:[%s193] sm:$0xff] %v223
        %s225 = scalar_lea.vmem %s193, 8
        %v226 = vld [vmem:[%s225] sm:$0xff]
        %v227 = vadd.f32 %v220, 0.0
        %v228 = vadd.f32 %v226, %v227
        %229 = vst [vmem:[%s225] sm:$0xff] %v228
      $region36: #{dice_loss.1} parent=27 // pred_fallthru
        _
      %p230 = scmp.lt.s32.totalorder %s214, 1024
      // Predicated region
      $region37: #{dice_loss.1} parent=27 // pred_check
        %p231 = pneg %p230
      $region38: #{dice_loss.1} parent=27 // pred_check_branch
        %233 = sbr.rel (%p231) target = $region40
      $region39: #{dice_loss.1} parent=27 // pred_region
        %v234 = vlaneseq
        %v235 = vshrl.u32 %v234, 7
        %v236 = vlaneseq
        %v237 = vand.u32 %v236, 127
        %v238 = vmul.u32 %v235, 128
        %v239 = vadd.s32 %v238, %v237
        %v240 = vstv %s214
        %vm241 = vcmp.lt.s32.totalorder %v239, %v240
        %v242 = vmul.f32 %v207, %v201
        %v243 = vsel %vm241, %v242, 0.0
        %v244 = vadd.f32 %v207, %v201
        %v245 = vsel %vm241, %v244, 0.0
        %v246 = vld [vmem:[%s193] sm:$0xff]
        %v247 = vadd.f32 %v243, 0.0
        %v248 = vadd.f32 %v246, %v247
        %249 = vst [vmem:[%s193] sm:$0xff] %v248
        %s250 = scalar_lea.vmem %s193, 8
        %v251 = vld [vmem:[%s250] sm:$0xff]
        %v252 = vadd.f32 %v245, 0.0
        %v253 = vadd.f32 %v251, %v252
        %254 = vst [vmem:[%s250] sm:$0xff] %v253
      $region40: #{dice_loss.1} parent=27 // pred_fallthru
        _
      %p255 = scmp.lt.s32.totalorder %s19, 1
      %s256 = scalar_select %p255, %s19, 1
      %s257 = smul.addr %s256, 2
      %s258 = smul.addr %s257, 8
      %s259 = scalar_lea.vmem %s3, %s258
      // Predicated region
      $region41: #{dice_loss.1} parent=27 // pred_check
        %p260 = pneg %p101
      $region42: #{dice_loss.1} parent=27 // pred_check_branch
        %262 = sbr.rel (%p260) target = $region44
      $region43: #{dice_loss.1} parent=27 // pred_region
        _
      $region44: #{dice_loss.1} parent=27 // pred_fallthru
        _
    $region28: #{dice_loss.1} parent=5 // pred_fallthru
      _
    %p263 = scmp.le.s32.totalorder 2, %s10
    // Predicated region
    $region45: #{dice_loss.1} parent=5 // pred_check
      %p264 = pneg %p263
    $region46: #{dice_loss.1} parent=5 // pred_check_branch
      %266 = sbr.rel (%p264) target = $region48
    $region47: #{dice_loss.1} parent=5 // pred_region
      %s267 = ssub.s32 %s10, 2
      // Predicated region
      $region49: #{dice_loss.1} parent=47 // pred_check
        %p268 = pneg %p107
      $region50: #{dice_loss.1} parent=47 // pred_check_branch
        %270 = sbr.rel (%p268) target = $region52
      $region51: #{dice_loss.1} parent=47 // pred_region
        %p271 = scmp.lt.s32.totalorder %s21, 1
        %s272 = scalar_select %p271, %s21, 1
        %s273 = smul.addr %s272, 2
        %s274 = smul.addr %s273, 8
        %s275 = scalar_lea.vmem %s3, %s274
      $region52: #{dice_loss.1} parent=47 // pred_fallthru
        _
    $region48: #{dice_loss.1} parent=5 // pred_fallthru
      _
  $region6: #{dice_loss.1} parent=0 // loop_footer
    %s14 = sadd.s32 1, %s10
  $region7: #{dice_loss.1} parent=0 // loop_footer_branch
    %9 = sbr.rel target = $region3
  $region8: #{dice_loss.1} parent=0 // loop_exit
    _

</llo_original>
